<compile_context>
chip_gen: v5e
topology: v5e:2x2
jax: 0.10.0
libtpu: 0.0.40
codegen_flags: <defaults>
</compile_context>

<pallas_src>
import functools
import numpy as np
import jax
import jax.numpy as jnp
from jax.experimental import pallas as pl
from jax.experimental.pallas import tpu as pltpu

EMB_DIM = 20
VOCAB = 7
VOCAB_PAD = 8          # sublane-padded fused gate table rows
PAD_IDX = 6
OUT_DIM = 6
OUT_PAD = 128          # lane-dense padded FC output width
SUBLANE = 8


def decoder_lstm_kernel(tok_ref, h0_ref, c0_ref, table_ref, whh_ref,
                        wfc_ref, bfc_ref,
                        out_ref, hn_ref, cn_ref,
                        *, hidden_size, seq_len, batch):
    """Single-invocation kernel.

    tok_ref:  (T*B, 1)        int32 token ids, time-major rows t*B + b
    h0/c0:    (B, H)          f32 initial states (batch padded to 8)
    table:    (VOCAB_PAD, 4H) f32 fused  emb @ W_ih + (b_ih + b_hh)
    whh:      (H, 4H)         f32 (i|f|g|o gate order, PyTorch convention)
    wfc:      (H, OUT_PAD)    f32 (zero-padded beyond column 6)
    bfc:      (1, OUT_PAD)    f32
    out_ref:  (B, T*OUT_PAD)  f32 batch-major logits slab
    hn/cn:    (B, H)          f32 final states
    """
    H, T, B = hidden_size, seq_len, batch

    # ---- Fused embedding + input projection + bias: one-hot row-select
    # against the precomputed table, one small hoisted MXU pass for all steps.
    tok = tok_ref[...]                                            # (T*B, 1)
    vocab_ids = jax.lax.broadcasted_iota(jnp.int32, (T * B, VOCAB_PAD), 1)
    onehot = (tok == vocab_ids).astype(jnp.float32)               # (T*B, 8)
    x_proj = jnp.dot(onehot, table_ref[...],
                     preferred_element_type=jnp.float32)          # (T*B, 4H)

    w_hh = whh_ref[...]                                           # (H, 4H)
    w_fc = wfc_ref[...]                                           # (H, OUT_PAD)
    b_fc = bfc_ref[...]                                           # (1, OUT_PAD)
    h = h0_ref[...]                                               # (B, H)
    c = c0_ref[...]                                               # (B, H)

    # --- Statically-unrolled recurrence (T small & fixed): carries stay in
    # vregs. Only h @ W_hh is on the serial chain.
    # TODO(synk): pltpu.matmul_push_rhs/matmul_acc_lhs/matmul_pop could keep
    # W_hh resident in the MXU weight staging across the T steps; kept as
    # jnp.dot for lowering robustness.
    for t in range(T):
        gates = x_proj[t * B:(t + 1) * B, :] + jnp.dot(
            h, w_hh, preferred_element_type=jnp.float32)          # (B, 4H)

        sig = jax.nn.sigmoid(gates)     # full-width (4H = 128 lanes) EUP pass
        tnh = jnp.tanh(gates)           # full-width EUP pass
        i_g = sig[:, 0 * H:1 * H]
        f_g = sig[:, 1 * H:2 * H]
        g_g = tnh[:, 2 * H:3 * H]
        o_g = sig[:, 3 * H:4 * H]

        c = f_g * c + i_g * g_g
        h = o_g * jnp.tanh(c)

        # Per-step FC on the fresh h (off the serial chain): one full
        # lane-dense (8,128) vreg store into the batch-major output slab.
        out_ref[:, t * OUT_PAD:(t + 1) * OUT_PAD] = (
            jnp.dot(h, w_fc, preferred_element_type=jnp.float32) + b_fc
        ).astype(out_ref.dtype)

    hn_ref[...] = h
    cn_ref[...] = c


@functools.partial(jax.jit, static_argnames=("hidden_size",))
def decoder_lstm_forward(inputs, states, params, *, hidden_size):
    """Mirrors DecoderLSTM.forward.

    inputs: (B, T) integer tokens
    states: (h0, c0), each (1, B, H)
    returns: outputs (B, T, 6), (h_n, c_n) each (1, B, H)
    """
    h0, c0 = states
    B, T = inputs.shape
    H = hidden_size
    B_pad = ((B + SUBLANE - 1) // SUBLANE) * SUBLANE

    # Tiny int glue only: pad batch with padding_idx tokens (=> gates = bias,
    # rows discarded afterwards), go time-major flat. No f32 embedding slab.
    tok = jnp.pad(inputs.astype(jnp.int32), ((0, B_pad - B), (0, 0)),
                  constant_values=PAD_IDX)                        # (B_pad, T)
    tok_tm = tok.T.reshape(T * B_pad, 1)                          # rows t*B+b

    h0p = jnp.pad(h0[0].astype(jnp.float32), ((0, B_pad - B), (0, 0)))
    c0p = jnp.pad(c0[0].astype(jnp.float32), ((0, B_pad - B), (0, 0)))

    kernel = functools.partial(decoder_lstm_kernel,
                               hidden_size=H, seq_len=T, batch=B_pad)
    vmem = pl.BlockSpec(memory_space=pltpu.MemorySpace.VMEM)

    # TODO(synk): at larger batch, add a grid axis over batch tiles with
    # dimension_semantics=("parallel",) so the second v7x TensorCore is used.
    out2d, h_n, c_n = pl.pallas_call(
        kernel,
        out_shape=(
            jax.ShapeDtypeStruct((B_pad, T * OUT_PAD), jnp.float32),
            jax.ShapeDtypeStruct((B_pad, H), jnp.float32),
            jax.ShapeDtypeStruct((B_pad, H), jnp.float32),
        ),
        in_specs=[vmem] * 7,
        out_specs=(vmem, vmem, vmem),
    )(
        tok_tm, h0p, c0p,
        params["gate_table_pad"], params["w_hh_t"],
        params["w_fc_t_pad"], params["b_fc_pad"],
    )

    # Batch-major slab: one reshape + slice, no transpose.
    outputs = out2d.reshape(B_pad, T, OUT_PAD)[:B, :, :OUT_DIM]    # (B, T, 6)
    return outputs, (h_n[:B][None], c_n[:B][None])


def init_params(key, hidden_size):
    """Deterministic synthetic params, PyTorch-style uniform(-1/sqrt(H), 1/sqrt(H))."""
    H = hidden_size
    k = 1.0 / np.sqrt(H)
    keys = jax.random.split(key, 8)
    u = lambda kk, shape, bound: jax.random.uniform(
        kk, shape, jnp.float32, minval=-bound, maxval=bound)

    emb = jax.random.normal(keys[0], (VOCAB, EMB_DIM), jnp.float32)
    emb = emb.at[PAD_IDX].set(0.0)                          # padding_idx=6

    w_ih = u(keys[1], (4 * H, EMB_DIM), k)                  # PyTorch (4H, E)
    w_hh = u(keys[2], (4 * H, H), k)                        # PyTorch (4H, H)
    b_ih = u(keys[3], (4 * H,), k)
    b_hh = u(keys[4], (4 * H,), k)
    w_fc = u(keys[5], (OUT_DIM, H), 1.0 / np.sqrt(H))       # PyTorch (6, H)
    b_fc = u(keys[6], (OUT_DIM,), 1.0 / np.sqrt(H))

    w_ih_t = w_ih.T                                         # (E, 4H)
    b_gates = (b_ih + b_hh)[None, :]                        # (1, 4H)

    # Fused per-token gate-input table: emb @ W_ih + (b_ih + b_hh).
    # padding_idx row (zero embedding) is exactly the bias.
    gate_table = emb @ w_ih_t + b_gates                     # (VOCAB, 4H)
    gate_table_pad = jnp.zeros((VOCAB_PAD, 4 * H), jnp.float32)
    gate_table_pad = gate_table_pad.at[:VOCAB, :].set(gate_table)

    w_fc_t = w_fc.T                                         # (H, 6)
    w_fc_t_pad = jnp.zeros((H, OUT_PAD), jnp.float32).at[:, :OUT_DIM].set(w_fc_t)
    b_fc_pad = jnp.zeros((1, OUT_PAD), jnp.float32).at[0, :OUT_DIM].set(b_fc)

    return {
        "embedding": emb,                                   # reference
        "w_ih_t": w_ih_t,                                   # reference
        "w_hh_t": w_hh.T,                                   # (H, 4H) kernel + reference
        "b_gates": b_gates,                                 # reference
        "gate_table_pad": gate_table_pad,                   # (8, 4H) kernel
        "w_fc_t": w_fc_t,                                   # reference
        "b_fc": b_fc[None, :],                              # reference
        "w_fc_t_pad": w_fc_t_pad,                           # (H, 128) kernel
        "b_fc_pad": b_fc_pad,                               # (1, 128) kernel
    }


def reference_forward(inputs, states, params):
    """Pure-JAX reference (matches torch LSTM semantics, gate order i,f,g,o)."""
    h0, c0 = states
    emb = jnp.take(params["embedding"], inputs.astype(jnp.int32), axis=0)
    emb_tm = jnp.transpose(emb, (1, 0, 2))

    def step(carry, x_t):
        h, c = carry
        gates = x_t @ params["w_ih_t"] + h @ params["w_hh_t"] + params["b_gates"]
        i, f, g, o = jnp.split(gates, 4, axis=-1)
        i, f, o = jax.nn.sigmoid(i), jax.nn.sigmoid(f), jax.nn.sigmoid(o)
        g = jnp.tanh(g)
        c = f * c + i * g
        h = o * jnp.tanh(c)
        return (h, c), h

    (hT, cT), hs = jax.lax.scan(step, (h0[0], c0[0]), emb_tm)
    outs = hs @ params["w_fc_t"] + params["b_fc"]           # (T, B, 6)
    return jnp.transpose(outs, (1, 0, 2)), (hT[None], cT[None])


if __name__ == "__main__":
    B, T, H = 2, 8, 32
    key = jax.random.PRNGKey(0)
    k_par, k_tok, k_h, k_c = jax.random.split(key, 4)

    params = init_params(k_par, H)
    inputs = jax.random.randint(k_tok, (B, T), 0, VOCAB, dtype=jnp.int32)
    h0 = jax.random.normal(k_h, (1, B, H), jnp.float32)
    c0 = jax.random.normal(k_c, (1, B, H), jnp.float32)

    outputs, (h_n, c_n) = decoder_lstm_forward(inputs, (h0, c0), params,
                                               hidden_size=H)
    jax.block_until_ready((outputs, h_n, c_n))

    ref_out, (ref_h, ref_c) = reference_forward(inputs, (h0, c0), params)
    np.testing.assert_allclose(np.asarray(outputs), np.asarray(ref_out),
                               rtol=2e-3, atol=2e-3)
    np.testing.assert_allclose(np.asarray(h_n), np.asarray(ref_h),
                               rtol=2e-3, atol=2e-3)
    np.testing.assert_allclose(np.asarray(c_n), np.asarray(ref_c),
                               rtol=2e-3, atol=2e-3)

    assert outputs.shape == (B, T, OUT_DIM)
    assert h_n.shape == (1, B, H) and c_n.shape == (1, B, H)
    print("KERNEL_OK")
</pallas_src>

<mosaic_0001>
module attributes {stable_mosaic.version = 11 : i64} {
  func.func @decoder_lstm_kernel(%arg0: memref<64x1xi32, #tpu.memory_space<vmem>>, %arg1: memref<8x32xf32, #tpu.memory_space<vmem>>, %arg2: memref<8x32xf32, #tpu.memory_space<vmem>>, %arg3: memref<8x128xf32, #tpu.memory_space<vmem>>, %arg4: memref<32x128xf32, #tpu.memory_space<vmem>>, %arg5: memref<32x128xf32, #tpu.memory_space<vmem>>, %arg6: memref<1x128xf32, #tpu.memory_space<vmem>>, %arg7: memref<8x1024xf32, #tpu.memory_space<vmem>>, %arg8: memref<8x32xf32, #tpu.memory_space<vmem>>, %arg9: memref<8x32xf32, #tpu.memory_space<vmem>>) attributes {dimension_semantics = [], scalar_prefetch = 0 : i64, scratch_operands = 0 : i64, tpu.core_type = #tpu.core_type<tc>} {
    %c0 = arith.constant 0 : index
    %c0_0 = arith.constant 0 : index
    %0 = vector.load %arg0[%c0, %c0_0] : memref<64x1xi32, #tpu.memory_space<vmem>>, vector<64x1xi32>
    %1 = tpu.iota {dimensions = array<i32: 1>} : vector<64x8xi32>
    %2 = vector.broadcast %0 : vector<64x1xi32> to vector<64x8xi32>
    %3 = arith.cmpi eq, %2, %1 : vector<64x8xi32>
    %4 = arith.extui %3 : vector<64x8xi1> to vector<64x8xi32>
    %5 = arith.sitofp %4 : vector<64x8xi32> to vector<64x8xf32>
    %c0_1 = arith.constant 0 : index
    %c0_2 = arith.constant 0 : index
    %6 = vector.load %arg3[%c0_1, %c0_2] : memref<8x128xf32, #tpu.memory_space<vmem>>, vector<8x128xf32>
    %cst = arith.constant dense<0.000000e+00> : vector<64x128xf32>
    %7 = tpu.matmul %5, %6, %cst {dimension_numbers = #tpu.dot_dimension_numbers<[1], [0], [0], [1], [0, 0, 1, 1], [], []>} : vector<64x8xf32>, vector<8x128xf32>, vector<64x128xf32> -> vector<64x128xf32>
    %c0_3 = arith.constant 0 : index
    %c0_4 = arith.constant 0 : index
    %8 = vector.load %arg4[%c0_3, %c0_4] : memref<32x128xf32, #tpu.memory_space<vmem>>, vector<32x128xf32>
    %c0_5 = arith.constant 0 : index
    %c0_6 = arith.constant 0 : index
    %9 = vector.load %arg5[%c0_5, %c0_6] : memref<32x128xf32, #tpu.memory_space<vmem>>, vector<32x128xf32>
    %c0_7 = arith.constant 0 : index
    %c0_8 = arith.constant 0 : index
    %10 = vector.load %arg6[%c0_7, %c0_8] : memref<1x128xf32, #tpu.memory_space<vmem>>, vector<1x128xf32>
    %c0_9 = arith.constant 0 : index
    %c0_10 = arith.constant 0 : index
    %11 = vector.load %arg1[%c0_9, %c0_10] : memref<8x32xf32, #tpu.memory_space<vmem>>, vector<8x32xf32>
    %c0_11 = arith.constant 0 : index
    %c0_12 = arith.constant 0 : index
    %12 = vector.load %arg2[%c0_11, %c0_12] : memref<8x32xf32, #tpu.memory_space<vmem>>, vector<8x32xf32>
    %13 = vector.extract_strided_slice %7 {offsets = [0, 0], sizes = [8, 128], strides = [1, 1]} : vector<64x128xf32> to vector<8x128xf32>
    %cst_13 = arith.constant dense<0.000000e+00> : vector<8x128xf32>
    %14 = tpu.matmul %11, %8, %cst_13 {dimension_numbers = #tpu.dot_dimension_numbers<[1], [0], [0], [1], [0, 0, 1, 1], [], []>} : vector<8x32xf32>, vector<32x128xf32>, vector<8x128xf32> -> vector<8x128xf32>
    %15 = arith.addf %13, %14 : vector<8x128xf32>
    %16 = arith.negf %15 : vector<8x128xf32>
    %17 = math.exp %16 : vector<8x128xf32>
    %cst_14 = arith.constant 1.000000e+00 : f32
    %18 = vector.broadcast %cst_14 : f32 to vector<8x128xf32>
    %19 = arith.addf %18, %17 : vector<8x128xf32>
    %20 = arith.divf %18, %19 : vector<8x128xf32>
    %21 = math.tanh %15 : vector<8x128xf32>
    %22 = vector.extract_strided_slice %20 {offsets = [0, 0], sizes = [8, 32], strides = [1, 1]} : vector<8x128xf32> to vector<8x32xf32>
    %23 = vector.extract_strided_slice %20 {offsets = [0, 32], sizes = [8, 32], strides = [1, 1]} : vector<8x128xf32> to vector<8x32xf32>
    %24 = vector.extract_strided_slice %21 {offsets = [0, 64], sizes = [8, 32], strides = [1, 1]} : vector<8x128xf32> to vector<8x32xf32>
    %25 = vector.extract_strided_slice %20 {offsets = [0, 96], sizes = [8, 32], strides = [1, 1]} : vector<8x128xf32> to vector<8x32xf32>
    %26 = arith.mulf %23, %12 : vector<8x32xf32>
    %27 = arith.mulf %22, %24 : vector<8x32xf32>
    %28 = arith.addf %26, %27 : vector<8x32xf32>
    %29 = math.tanh %28 : vector<8x32xf32>
    %30 = arith.mulf %25, %29 : vector<8x32xf32>
    %cst_15 = arith.constant dense<0.000000e+00> : vector<8x128xf32>
    %31 = tpu.matmul %30, %9, %cst_15 {dimension_numbers = #tpu.dot_dimension_numbers<[1], [0], [0], [1], [0, 0, 1, 1], [], []>} : vector<8x32xf32>, vector<32x128xf32>, vector<8x128xf32> -> vector<8x128xf32>
    %32 = vector.broadcast %10 : vector<1x128xf32> to vector<8x128xf32>
    %33 = arith.addf %31, %32 : vector<8x128xf32>
    %c0_16 = arith.constant 0 : index
    %c0_17 = arith.constant 0 : index
    %34 = vector.load %arg7[%c0_16, %c0_17] : memref<8x1024xf32, #tpu.memory_space<vmem>>, vector<8x128xf32>
    tpu.vector_store %arg7[%c0_16, %c0_17], %33 {strides = array<i32>} : memref<8x1024xf32, #tpu.memory_space<vmem>>, vector<8x128xf32>,
    %35 = vector.extract_strided_slice %7 {offsets = [8, 0], sizes = [8, 128], strides = [1, 1]} : vector<64x128xf32> to vector<8x128xf32>
    %cst_18 = arith.constant dense<0.000000e+00> : vector<8x128xf32>
    %36 = tpu.matmul %30, %8, %cst_18 {dimension_numbers = #tpu.dot_dimension_numbers<[1], [0], [0], [1], [0, 0, 1, 1], [], []>} : vector<8x32xf32>, vector<32x128xf32>, vector<8x128xf32> -> vector<8x128xf32>
    %37 = arith.addf %35, %36 : vector<8x128xf32>
    %38 = arith.negf %37 : vector<8x128xf32>
    %39 = math.exp %38 : vector<8x128xf32>
    %cst_19 = arith.constant 1.000000e+00 : f32
    %40 = vector.broadcast %cst_19 : f32 to vector<8x128xf32>
    %41 = arith.addf %40, %39 : vector<8x128xf32>
    %42 = arith.divf %40, %41 : vector<8x128xf32>
    %43 = math.tanh %37 : vector<8x128xf32>
    %44 = vector.extract_strided_slice %42 {offsets = [0, 0], sizes = [8, 32], strides = [1, 1]} : vector<8x128xf32> to vector<8x32xf32>
    %45 = vector.extract_strided_slice %42 {offsets = [0, 32], sizes = [8, 32], strides = [1, 1]} : vector<8x128xf32> to vector<8x32xf32>
    %46 = vector.extract_strided_slice %43 {offsets = [0, 64], sizes = [8, 32], strides = [1, 1]} : vector<8x128xf32> to vector<8x32xf32>
    %47 = vector.extract_strided_slice %42 {offsets = [0, 96], sizes = [8, 32], strides = [1, 1]} : vector<8x128xf32> to vector<8x32xf32>
    %48 = arith.mulf %45, %28 : vector<8x32xf32>
    %49 = arith.mulf %44, %46 : vector<8x32xf32>
    %50 = arith.addf %48, %49 : vector<8x32xf32>
    %51 = math.tanh %50 : vector<8x32xf32>
    %52 = arith.mulf %47, %51 : vector<8x32xf32>
    %cst_20 = arith.constant dense<0.000000e+00> : vector<8x128xf32>
    %53 = tpu.matmul %52, %9, %cst_20 {dimension_numbers = #tpu.dot_dimension_numbers<[1], [0], [0], [1], [0, 0, 1, 1], [], []>} : vector<8x32xf32>, vector<32x128xf32>, vector<8x128xf32> -> vector<8x128xf32>
    %54 = vector.broadcast %10 : vector<1x128xf32> to vector<8x128xf32>
    %55 = arith.addf %53, %54 : vector<8x128xf32>
    %c0_21 = arith.constant 0 : index
    %c128 = arith.constant 128 : index
    %56 = vector.load %arg7[%c0_21, %c128] : memref<8x1024xf32, #tpu.memory_space<vmem>>, vector<8x128xf32>
    tpu.vector_store %arg7[%c0_21, %c128], %55 {strides = array<i32>} : memref<8x1024xf32, #tpu.memory_space<vmem>>, vector<8x128xf32>,
    %57 = vector.extract_strided_slice %7 {offsets = [16, 0], sizes = [8, 128], strides = [1, 1]} : vector<64x128xf32> to vector<8x128xf32>
    %cst_22 = arith.constant dense<0.000000e+00> : vector<8x128xf32>
    %58 = tpu.matmul %52, %8, %cst_22 {dimension_numbers = #tpu.dot_dimension_numbers<[1], [0], [0], [1], [0, 0, 1, 1], [], []>} : vector<8x32xf32>, vector<32x128xf32>, vector<8x128xf32> -> vector<8x128xf32>
    %59 = arith.addf %57, %58 : vector<8x128xf32>
    %60 = arith.negf %59 : vector<8x128xf32>
    %61 = math.exp %60 : vector<8x128xf32>
    %cst_23 = arith.constant 1.000000e+00 : f32
    %62 = vector.broadcast %cst_23 : f32 to vector<8x128xf32>
    %63 = arith.addf %62, %61 : vector<8x128xf32>
    %64 = arith.divf %62, %63 : vector<8x128xf32>
    %65 = math.tanh %59 : vector<8x128xf32>
    %66 = vector.extract_strided_slice %64 {offsets = [0, 0], sizes = [8, 32], strides = [1, 1]} : vector<8x128xf32> to vector<8x32xf32>
    %67 = vector.extract_strided_slice %64 {offsets = [0, 32], sizes = [8, 32], strides = [1, 1]} : vector<8x128xf32> to vector<8x32xf32>
    %68 = vector.extract_strided_slice %65 {offsets = [0, 64], sizes = [8, 32], strides = [1, 1]} : vector<8x128xf32> to vector<8x32xf32>
    %69 = vector.extract_strided_slice %64 {offsets = [0, 96], sizes = [8, 32], strides = [1, 1]} : vector<8x128xf32> to vector<8x32xf32>
    %70 = arith.mulf %67, %50 : vector<8x32xf32>
    %71 = arith.mulf %66, %68 : vector<8x32xf32>
    %72 = arith.addf %70, %71 : vector<8x32xf32>
    %73 = math.tanh %72 : vector<8x32xf32>
    %74 = arith.mulf %69, %73 : vector<8x32xf32>
    %cst_24 = arith.constant dense<0.000000e+00> : vector<8x128xf32>
    %75 = tpu.matmul %74, %9, %cst_24 {dimension_numbers = #tpu.dot_dimension_numbers<[1], [0], [0], [1], [0, 0, 1, 1], [], []>} : vector<8x32xf32>, vector<32x128xf32>, vector<8x128xf32> -> vector<8x128xf32>
    %76 = vector.broadcast %10 : vector<1x128xf32> to vector<8x128xf32>
    %77 = arith.addf %75, %76 : vector<8x128xf32>
    %c0_25 = arith.constant 0 : index
    %c256 = arith.constant 256 : index
    %78 = vector.load %arg7[%c0_25, %c256] : memref<8x1024xf32, #tpu.memory_space<vmem>>, vector<8x128xf32>
    tpu.vector_store %arg7[%c0_25, %c256], %77 {strides = array<i32>} : memref<8x1024xf32, #tpu.memory_space<vmem>>, vector<8x128xf32>,
    %79 = vector.extract_strided_slice %7 {offsets = [24, 0], sizes = [8, 128], strides = [1, 1]} : vector<64x128xf32> to vector<8x128xf32>
    %cst_26 = arith.constant dense<0.000000e+00> : vector<8x128xf32>
    %80 = tpu.matmul %74, %8, %cst_26 {dimension_numbers = #tpu.dot_dimension_numbers<[1], [0], [0], [1], [0, 0, 1, 1], [], []>} : vector<8x32xf32>, vector<32x128xf32>, vector<8x128xf32> -> vector<8x128xf32>
    %81 = arith.addf %79, %80 : vector<8x128xf32>
    %82 = arith.negf %81 : vector<8x128xf32>
    %83 = math.exp %82 : vector<8x128xf32>
    %cst_27 = arith.constant 1.000000e+00 : f32
    %84 = vector.broadcast %cst_27 : f32 to vector<8x128xf32>
    %85 = arith.addf %84, %83 : vector<8x128xf32>
    %86 = arith.divf %84, %85 : vector<8x128xf32>
    %87 = math.tanh %81 : vector<8x128xf32>
    %88 = vector.extract_strided_slice %86 {offsets = [0, 0], sizes = [8, 32], strides = [1, 1]} : vector<8x128xf32> to vector<8x32xf32>
    %89 = vector.extract_strided_slice %86 {offsets = [0, 32], sizes = [8, 32], strides = [1, 1]} : vector<8x128xf32> to vector<8x32xf32>
    %90 = vector.extract_strided_slice %87 {offsets = [0, 64], sizes = [8, 32], strides = [1, 1]} : vector<8x128xf32> to vector<8x32xf32>
    %91 = vector.extract_strided_slice %86 {offsets = [0, 96], sizes = [8, 32], strides = [1, 1]} : vector<8x128xf32> to vector<8x32xf32>
    %92 = arith.mulf %89, %72 : vector<8x32xf32>
    %93 = arith.mulf %88, %90 : vector<8x32xf32>
    %94 = arith.addf %92, %93 : vector<8x32xf32>
    %95 = math.tanh %94 : vector<8x32xf32>
    %96 = arith.mulf %91, %95 : vector<8x32xf32>
    %cst_28 = arith.constant dense<0.000000e+00> : vector<8x128xf32>
    %97 = tpu.matmul %96, %9, %cst_28 {dimension_numbers = #tpu.dot_dimension_numbers<[1], [0], [0], [1], [0, 0, 1, 1], [], []>} : vector<8x32xf32>, vector<32x128xf32>, vector<8x128xf32> -> vector<8x128xf32>
    %98 = vector.broadcast %10 : vector<1x128xf32> to vector<8x128xf32>
    %99 = arith.addf %97, %98 : vector<8x128xf32>
    %c0_29 = arith.constant 0 : index
    %c384 = arith.constant 384 : index
    %100 = vector.load %arg7[%c0_29, %c384] : memref<8x1024xf32, #tpu.memory_space<vmem>>, vector<8x128xf32>
    tpu.vector_store %arg7[%c0_29, %c384], %99 {strides = array<i32>} : memref<8x1024xf32, #tpu.memory_space<vmem>>, vector<8x128xf32>,
    %101 = vector.extract_strided_slice %7 {offsets = [32, 0], sizes = [8, 128], strides = [1, 1]} : vector<64x128xf32> to vector<8x128xf32>
    %cst_30 = arith.constant dense<0.000000e+00> : vector<8x128xf32>
    %102 = tpu.matmul %96, %8, %cst_30 {dimension_numbers = #tpu.dot_dimension_numbers<[1], [0], [0], [1], [0, 0, 1, 1], [], []>} : vector<8x32xf32>, vector<32x128xf32>, vector<8x128xf32> -> vector<8x128xf32>
    %103 = arith.addf %101, %102 : vector<8x128xf32>
    %104 = arith.negf %103 : vector<8x128xf32>
    %105 = math.exp %104 : vector<8x128xf32>
    %cst_31 = arith.constant 1.000000e+00 : f32
    %106 = vector.broadcast %cst_31 : f32 to vector<8x128xf32>
    %107 = arith.addf %106, %105 : vector<8x128xf32>
    %108 = arith.divf %106, %107 : vector<8x128xf32>
    %109 = math.tanh %103 : vector<8x128xf32>
    %110 = vector.extract_strided_slice %108 {offsets = [0, 0], sizes = [8, 32], strides = [1, 1]} : vector<8x128xf32> to vector<8x32xf32>
    %111 = vector.extract_strided_slice %108 {offsets = [0, 32], sizes = [8, 32], strides = [1, 1]} : vector<8x128xf32> to vector<8x32xf32>
    %112 = vector.extract_strided_slice %109 {offsets = [0, 64], sizes = [8, 32], strides = [1, 1]} : vector<8x128xf32> to vector<8x32xf32>
    %113 = vector.extract_strided_slice %108 {offsets = [0, 96], sizes = [8, 32], strides = [1, 1]} : vector<8x128xf32> to vector<8x32xf32>
    %114 = arith.mulf %111, %94 : vector<8x32xf32>
    %115 = arith.mulf %110, %112 : vector<8x32xf32>
    %116 = arith.addf %114, %115 : vector<8x32xf32>
    %117 = math.tanh %116 : vector<8x32xf32>
    %118 = arith.mulf %113, %117 : vector<8x32xf32>
    %cst_32 = arith.constant dense<0.000000e+00> : vector<8x128xf32>
    %119 = tpu.matmul %118, %9, %cst_32 {dimension_numbers = #tpu.dot_dimension_numbers<[1], [0], [0], [1], [0, 0, 1, 1], [], []>} : vector<8x32xf32>, vector<32x128xf32>, vector<8x128xf32> -> vector<8x128xf32>
    %120 = vector.broadcast %10 : vector<1x128xf32> to vector<8x128xf32>
    %121 = arith.addf %119, %120 : vector<8x128xf32>
    %c0_33 = arith.constant 0 : index
    %c512 = arith.constant 512 : index
    %122 = vector.load %arg7[%c0_33, %c512] : memref<8x1024xf32, #tpu.memory_space<vmem>>, vector<8x128xf32>
    tpu.vector_store %arg7[%c0_33, %c512], %121 {strides = array<i32>} : memref<8x1024xf32, #tpu.memory_space<vmem>>, vector<8x128xf32>,
    %123 = vector.extract_strided_slice %7 {offsets = [40, 0], sizes = [8, 128], strides = [1, 1]} : vector<64x128xf32> to vector<8x128xf32>
    %cst_34 = arith.constant dense<0.000000e+00> : vector<8x128xf32>
    %124 = tpu.matmul %118, %8, %cst_34 {dimension_numbers = #tpu.dot_dimension_numbers<[1], [0], [0], [1], [0, 0, 1, 1], [], []>} : vector<8x32xf32>, vector<32x128xf32>, vector<8x128xf32> -> vector<8x128xf32>
    %125 = arith.addf %123, %124 : vector<8x128xf32>
    %126 = arith.negf %125 : vector<8x128xf32>
    %127 = math.exp %126 : vector<8x128xf32>
    %cst_35 = arith.constant 1.000000e+00 : f32
    %128 = vector.broadcast %cst_35 : f32 to vector<8x128xf32>
    %129 = arith.addf %128, %127 : vector<8x128xf32>
    %130 = arith.divf %128, %129 : vector<8x128xf32>
    %131 = math.tanh %125 : vector<8x128xf32>
    %132 = vector.extract_strided_slice %130 {offsets = [0, 0], sizes = [8, 32], strides = [1, 1]} : vector<8x128xf32> to vector<8x32xf32>
    %133 = vector.extract_strided_slice %130 {offsets = [0, 32], sizes = [8, 32], strides = [1, 1]} : vector<8x128xf32> to vector<8x32xf32>
    %134 = vector.extract_strided_slice %131 {offsets = [0, 64], sizes = [8, 32], strides = [1, 1]} : vector<8x128xf32> to vector<8x32xf32>
    %135 = vector.extract_strided_slice %130 {offsets = [0, 96], sizes = [8, 32], strides = [1, 1]} : vector<8x128xf32> to vector<8x32xf32>
    %136 = arith.mulf %133, %116 : vector<8x32xf32>
    %137 = arith.mulf %132, %134 : vector<8x32xf32>
    %138 = arith.addf %136, %137 : vector<8x32xf32>
    %139 = math.tanh %138 : vector<8x32xf32>
    %140 = arith.mulf %135, %139 : vector<8x32xf32>
    %cst_36 = arith.constant dense<0.000000e+00> : vector<8x128xf32>
    %141 = tpu.matmul %140, %9, %cst_36 {dimension_numbers = #tpu.dot_dimension_numbers<[1], [0], [0], [1], [0, 0, 1, 1], [], []>} : vector<8x32xf32>, vector<32x128xf32>, vector<8x128xf32> -> vector<8x128xf32>
    %142 = vector.broadcast %10 : vector<1x128xf32> to vector<8x128xf32>
    %143 = arith.addf %141, %142 : vector<8x128xf32>
    %c0_37 = arith.constant 0 : index
    %c640 = arith.constant 640 : index
    %144 = vector.load %arg7[%c0_37, %c640] : memref<8x1024xf32, #tpu.memory_space<vmem>>, vector<8x128xf32>
    tpu.vector_store %arg7[%c0_37, %c640], %143 {strides = array<i32>} : memref<8x1024xf32, #tpu.memory_space<vmem>>, vector<8x128xf32>,
    %145 = vector.extract_strided_slice %7 {offsets = [48, 0], sizes = [8, 128], strides = [1, 1]} : vector<64x128xf32> to vector<8x128xf32>
    %cst_38 = arith.constant dense<0.000000e+00> : vector<8x128xf32>
    %146 = tpu.matmul %140, %8, %cst_38 {dimension_numbers = #tpu.dot_dimension_numbers<[1], [0], [0], [1], [0, 0, 1, 1], [], []>} : vector<8x32xf32>, vector<32x128xf32>, vector<8x128xf32> -> vector<8x128xf32>
    %147 = arith.addf %145, %146 : vector<8x128xf32>
    %148 = arith.negf %147 : vector<8x128xf32>
    %149 = math.exp %148 : vector<8x128xf32>
    %cst_39 = arith.constant 1.000000e+00 : f32
    %150 = vector.broadcast %cst_39 : f32 to vector<8x128xf32>
    %151 = arith.addf %150, %149 : vector<8x128xf32>
    %152 = arith.divf %150, %151 : vector<8x128xf32>
    %153 = math.tanh %147 : vector<8x128xf32>
    %154 = vector.extract_strided_slice %152 {offsets = [0, 0], sizes = [8, 32], strides = [1, 1]} : vector<8x128xf32> to vector<8x32xf32>
    %155 = vector.extract_strided_slice %152 {offsets = [0, 32], sizes = [8, 32], strides = [1, 1]} : vector<8x128xf32> to vector<8x32xf32>
    %156 = vector.extract_strided_slice %153 {offsets = [0, 64], sizes = [8, 32], strides = [1, 1]} : vector<8x128xf32> to vector<8x32xf32>
    %157 = vector.extract_strided_slice %152 {offsets = [0, 96], sizes = [8, 32], strides = [1, 1]} : vector<8x128xf32> to vector<8x32xf32>
    %158 = arith.mulf %155, %138 : vector<8x32xf32>
    %159 = arith.mulf %154, %156 : vector<8x32xf32>
    %160 = arith.addf %158, %159 : vector<8x32xf32>
    %161 = math.tanh %160 : vector<8x32xf32>
    %162 = arith.mulf %157, %161 : vector<8x32xf32>
    %cst_40 = arith.constant dense<0.000000e+00> : vector<8x128xf32>
    %163 = tpu.matmul %162, %9, %cst_40 {dimension_numbers = #tpu.dot_dimension_numbers<[1], [0], [0], [1], [0, 0, 1, 1], [], []>} : vector<8x32xf32>, vector<32x128xf32>, vector<8x128xf32> -> vector<8x128xf32>
    %164 = vector.broadcast %10 : vector<1x128xf32> to vector<8x128xf32>
    %165 = arith.addf %163, %164 : vector<8x128xf32>
    %c0_41 = arith.constant 0 : index
    %c768 = arith.constant 768 : index
    %166 = vector.load %arg7[%c0_41, %c768] : memref<8x1024xf32, #tpu.memory_space<vmem>>, vector<8x128xf32>
    tpu.vector_store %arg7[%c0_41, %c768], %165 {strides = array<i32>} : memref<8x1024xf32, #tpu.memory_space<vmem>>, vector<8x128xf32>,
    %167 = vector.extract_strided_slice %7 {offsets = [56, 0], sizes = [8, 128], strides = [1, 1]} : vector<64x128xf32> to vector<8x128xf32>
    %cst_42 = arith.constant dense<0.000000e+00> : vector<8x128xf32>
    %168 = tpu.matmul %162, %8, %cst_42 {dimension_numbers = #tpu.dot_dimension_numbers<[1], [0], [0], [1], [0, 0, 1, 1], [], []>} : vector<8x32xf32>, vector<32x128xf32>, vector<8x128xf32> -> vector<8x128xf32>
    %169 = arith.addf %167, %168 : vector<8x128xf32>
    %170 = arith.negf %169 : vector<8x128xf32>
    %171 = math.exp %170 : vector<8x128xf32>
    %cst_43 = arith.constant 1.000000e+00 : f32
    %172 = vector.broadcast %cst_43 : f32 to vector<8x128xf32>
    %173 = arith.addf %172, %171 : vector<8x128xf32>
    %174 = arith.divf %172, %173 : vector<8x128xf32>
    %175 = math.tanh %169 : vector<8x128xf32>
    %176 = vector.extract_strided_slice %174 {offsets = [0, 0], sizes = [8, 32], strides = [1, 1]} : vector<8x128xf32> to vector<8x32xf32>
    %177 = vector.extract_strided_slice %174 {offsets = [0, 32], sizes = [8, 32], strides = [1, 1]} : vector<8x128xf32> to vector<8x32xf32>
    %178 = vector.extract_strided_slice %175 {offsets = [0, 64], sizes = [8, 32], strides = [1, 1]} : vector<8x128xf32> to vector<8x32xf32>
    %179 = vector.extract_strided_slice %174 {offsets = [0, 96], sizes = [8, 32], strides = [1, 1]} : vector<8x128xf32> to vector<8x32xf32>
    %180 = arith.mulf %177, %160 : vector<8x32xf32>
    %181 = arith.mulf %176, %178 : vector<8x32xf32>
    %182 = arith.addf %180, %181 : vector<8x32xf32>
    %183 = math.tanh %182 : vector<8x32xf32>
    %184 = arith.mulf %179, %183 : vector<8x32xf32>
    %cst_44 = arith.constant dense<0.000000e+00> : vector<8x128xf32>
    %185 = tpu.matmul %184, %9, %cst_44 {dimension_numbers = #tpu.dot_dimension_numbers<[1], [0], [0], [1], [0, 0, 1, 1], [], []>} : vector<8x32xf32>, vector<32x128xf32>, vector<8x128xf32> -> vector<8x128xf32>
    %186 = vector.broadcast %10 : vector<1x128xf32> to vector<8x128xf32>
    %187 = arith.addf %185, %186 : vector<8x128xf32>
    %c0_45 = arith.constant 0 : index
    %c896 = arith.constant 896 : index
    %188 = vector.load %arg7[%c0_45, %c896] : memref<8x1024xf32, #tpu.memory_space<vmem>>, vector<8x128xf32>
    tpu.vector_store %arg7[%c0_45, %c896], %187 {strides = array<i32>} : memref<8x1024xf32, #tpu.memory_space<vmem>>, vector<8x128xf32>,
    %c0_46 = arith.constant 0 : index
    %c0_47 = arith.constant 0 : index
    %189 = vector.load %arg8[%c0_46, %c0_47] : memref<8x32xf32, #tpu.memory_space<vmem>>, vector<8x32xf32>
    tpu.vector_store %arg8[%c0_46, %c0_47], %184 {strides = array<i32>} : memref<8x32xf32, #tpu.memory_space<vmem>>, vector<8x32xf32>,
    %c0_48 = arith.constant 0 : index
    %c0_49 = arith.constant 0 : index
    %190 = vector.load %arg9[%c0_48, %c0_49] : memref<8x32xf32, #tpu.memory_space<vmem>>, vector<8x32xf32>
    tpu.vector_store %arg9[%c0_48, %c0_49], %182 {strides = array<i32>} : memref<8x32xf32, #tpu.memory_space<vmem>>, vector<8x32xf32>,
    return
  }
}

</mosaic_0001>

<llo_original>
// kernel: decoder_lstm_forward.1
$region0: #{decoder_lstm_forward.1}
  #allocation0 [shape = 'u32[]', space=smem, size = 0x4, offset = 0x4, fixed_abs, tag = 'smem constant byte address 0x4 - core index']
  #allocation1 [shape = 'u32[72,128]{1,0:T(1,128)}', space=vmem, size = 0x9000, scoped, tag = 'internal scratch']
  %s0 = inlined_call_operand.vmem [shape: s32[64,1], index: 0, kind: input, shape index: {}]
  %s1 = inlined_call_operand.vmem [shape: f32[8,32], index: 1, kind: input, shape index: {}]
  %s2 = inlined_call_operand.vmem [shape: f32[8,32], index: 2, kind: input, shape index: {}]
  %s3 = inlined_call_operand.vmem [shape: f32[8,128], index: 3, kind: input, shape index: {}]
  %s4 = inlined_call_operand.vmem [shape: f32[32,128], index: 4, kind: input, shape index: {}]
  %s5 = inlined_call_operand.vmem [shape: f32[32,128], index: 5, kind: input, shape index: {}]
  %s6 = inlined_call_operand.vmem [shape: f32[1,128], index: 6, kind: input, shape index: {}]
  %s7 = inlined_call_operand.vmem [shape: f32[8,1024], index: 7, kind: output, shape index: {0}]
  %s8 = inlined_call_operand.vmem [shape: f32[8,32], index: 8, kind: output, shape index: {1}]
  %s9 = inlined_call_operand.vmem [shape: f32[8,32], index: 9, kind: output, shape index: {2}]
  %10 = xla_tuple %s7, %s8, %s9
  %s11 = sld [smem:[#allocation0]]
  $region54: #{decoder_lstm_forward.1} parent=0
    _
  %s13 = ssub.s32 1, %s11
  %s14 = scalar_select 0, %s13, %s11
  // Predicated region
  $region2: #{decoder_lstm_forward.1} parent=0 // pred_check
    _
  $region3: #{decoder_lstm_forward.1} parent=0 // pred_check_branch
    %16 = sbr.rel (0) target = $region5
  $region4: #{decoder_lstm_forward.1} parent=0 // pred_region
    _
  $region5: #{decoder_lstm_forward.1} parent=0 // pred_fallthru
    _
  // Predicated region
  $region6: #{decoder_lstm_forward.1} parent=0 // pred_check
    _
  $region7: #{decoder_lstm_forward.1} parent=0 // pred_check_branch
    %18 = sbr.rel (0) target = $region9
  $region8: #{decoder_lstm_forward.1} parent=0 // pred_region
    _
  $region9: #{decoder_lstm_forward.1} parent=0 // pred_fallthru
    _
  // Predicated region
  $region10: #{decoder_lstm_forward.1} parent=0 // pred_check
    _
  $region11: #{decoder_lstm_forward.1} parent=0 // pred_check_branch
    %20 = sbr.rel (0) target = $region13
  $region12: #{decoder_lstm_forward.1} parent=0 // pred_region
    _
  $region13: #{decoder_lstm_forward.1} parent=0 // pred_fallthru
    _
  // Predicated region
  $region14: #{decoder_lstm_forward.1} parent=0 // pred_check
    _
  $region15: #{decoder_lstm_forward.1} parent=0 // pred_check_branch
    %22 = sbr.rel (0) target = $region17
  $region16: #{decoder_lstm_forward.1} parent=0 // pred_region
    _
  $region17: #{decoder_lstm_forward.1} parent=0 // pred_fallthru
    _
  // Predicated region
  $region18: #{decoder_lstm_forward.1} parent=0 // pred_check
    _
  $region19: #{decoder_lstm_forward.1} parent=0 // pred_check_branch
    %24 = sbr.rel (0) target = $region21
  $region20: #{decoder_lstm_forward.1} parent=0 // pred_region
    _
  $region21: #{decoder_lstm_forward.1} parent=0 // pred_fallthru
    _
  // Predicated region
  $region22: #{decoder_lstm_forward.1} parent=0 // pred_check
    _
  $region23: #{decoder_lstm_forward.1} parent=0 // pred_check_branch
    %26 = sbr.rel (0) target = $region25
  $region24: #{decoder_lstm_forward.1} parent=0 // pred_region
    _
  $region25: #{decoder_lstm_forward.1} parent=0 // pred_fallthru
    _
  // Predicated region
  $region26: #{decoder_lstm_forward.1} parent=0 // pred_check
    _
  $region27: #{decoder_lstm_forward.1} parent=0 // pred_check_branch
    %28 = sbr.rel (0) target = $region29
  $region28: #{decoder_lstm_forward.1} parent=0 // pred_region
    _
  $region29: #{decoder_lstm_forward.1} parent=0 // pred_fallthru
    _
  %v29 = vld [vmem:[%s0] sm:$0xff]
  %v30 = vld [vmem:[%s0 + $0x8] sm:$0xff]
  %v31 = vld [vmem:[%s0 + $0x10] sm:$0xff]
  %v32 = vld [vmem:[%s0 + $0x18] sm:$0xff]
  %v33 = vld [vmem:[%s0 + $0x20] sm:$0xff]
  %v34 = vld [vmem:[%s0 + $0x28] sm:$0xff]
  %v35 = vld [vmem:[%s0 + $0x30] sm:$0xff]
  %v36 = vld [vmem:[%s0 + $0x38] sm:$0xff]
  %v37 = vlaneseq
  %v38 = vand.u32 %v37, 127
  %39 = vset.pattern.permute.xlu0 0
  %40 = vperm.xlu0 %39, %v29
  %v41 = vpop.permute.xlu0 %40
  %42 = vset.pattern.permute.xlu0 0
  %43 = vperm.xlu0 %42, %v30
  %v44 = vpop.permute.xlu0 %43
  %45 = vset.pattern.permute.xlu0 0
  %46 = vperm.xlu0 %45, %v31
  %v47 = vpop.permute.xlu0 %46
  %48 = vset.pattern.permute.xlu0 0
  %49 = vperm.xlu0 %48, %v32
  %v50 = vpop.permute.xlu0 %49
  %51 = vset.pattern.permute.xlu0 0
  %52 = vperm.xlu0 %51, %v33
  %v53 = vpop.permute.xlu0 %52
  %54 = vset.pattern.permute.xlu0 0
  %55 = vperm.xlu0 %54, %v34
  %v56 = vpop.permute.xlu0 %55
  %57 = vset.pattern.permute.xlu0 0
  %58 = vperm.xlu0 %57, %v35
  %v59 = vpop.permute.xlu0 %58
  %60 = vset.pattern.permute.xlu0 0
  %61 = vperm.xlu0 %60, %v36
  %v62 = vpop.permute.xlu0 %61
  %vm63 = vcmp.eq.s32.totalorder %v41, %v38
  %vm64 = vcmp.eq.s32.totalorder %v44, %v38
  %vm65 = vcmp.eq.s32.totalorder %v47, %v38
  %vm66 = vcmp.eq.s32.totalorder %v50, %v38
  %vm67 = vcmp.eq.s32.totalorder %v53, %v38
  %vm68 = vcmp.eq.s32.totalorder %v56, %v38
  %vm69 = vcmp.eq.s32.totalorder %v59, %v38
  %vm70 = vcmp.eq.s32.totalorder %v62, %v38
  %v71 = vsel %vm63, 1, 0
  %v72 = vsel %vm64, 1, 0
  %v73 = vsel %vm65, 1, 0
  %v74 = vsel %vm66, 1, 0
  %v75 = vsel %vm67, 1, 0
  %v76 = vsel %vm68, 1, 0
  %v77 = vsel %vm69, 1, 0
  %v78 = vsel %vm70, 1, 0
  %v79 = vcvt.s32.f32 %v71
  %v80 = vcvt.s32.f32 %v72
  %v81 = vcvt.s32.f32 %v73
  %v82 = vcvt.s32.f32 %v74
  %v83 = vcvt.s32.f32 %v75
  %v84 = vcvt.s32.f32 %v76
  %v85 = vcvt.s32.f32 %v77
  %v86 = vcvt.s32.f32 %v78
  %v87 = vld [vmem:[%s3] sm:$0xff]
  %vm88 = vcmask 64512
  %v90 = vsel %vm88, %v79, 0
  %v93 = vsel %vm88, %v80, 0
  %v96 = vsel %vm88, %v81, 0
  %v99 = vsel %vm88, %v82, 0
  %v102 = vsel %vm88, %v83, 0
  %v105 = vsel %vm88, %v84, 0
  %v108 = vsel %vm88, %v85, 0
  %v111 = vsel %vm88, %v86, 0
  %113 = vmatpush.msra.mxu0 0.0
  %114 = vmatpush.msra.mxu0 0.0
  %115 = vmatpush.msra.mxu0 0.0
  %116 = vmatpush.msra.mxu0 0.0
  %117 = vmatpush.msra.mxu0 0.0
  %118 = vmatpush.msra.mxu0 0.0
  %119 = vmatpush.msra.mxu0 0.0
  %120 = vmatpush.msra.mxu0 0.0
  %121 = vmatpush.msra.mxu0 0.0
  %122 = vmatpush.msra.mxu0 0.0
  %123 = vmatpush.msra.mxu0 0.0
  %124 = vmatpush.msra.mxu0 0.0
  %125 = vmatpush.msra.mxu0 0.0
  %126 = vmatpush.msra.mxu0 0.0
  %127 = vmatpush.msra.mxu0 0.0
  %128 = vmatpush.msra.mxu0 %v87
  %129 = vmatmul.f32.gmra.mxu0 %v90
  %v130 = vpop.f32.mrf.mxu0
  %v131 = vadd.f32 0.0, %v130
  %132 = vmatmul.f32.gmra.mxu0 %v93
  %v133 = vpop.f32.mrf.mxu0
  %v134 = vadd.f32 0.0, %v133
  %135 = vmatmul.f32.gmra.mxu0 %v96
  %v136 = vpop.f32.mrf.mxu0
  %v137 = vadd.f32 0.0, %v136
  %138 = vmatmul.f32.gmra.mxu0 %v99
  %v139 = vpop.f32.mrf.mxu0
  %v140 = vadd.f32 0.0, %v139
  %141 = vmatmul.f32.gmra.mxu0 %v102
  %v142 = vpop.f32.mrf.mxu0
  %v143 = vadd.f32 0.0, %v142
  %144 = vmatmul.f32.gmra.mxu0 %v105
  %v145 = vpop.f32.mrf.mxu0
  %v146 = vadd.f32 0.0, %v145
  %147 = vmatmul.f32.gmra.mxu0 %v108
  %v148 = vpop.f32.mrf.mxu0
  %v149 = vadd.f32 0.0, %v148
  %150 = vmatmul.f32.gmra.mxu0 %v111
  %v151 = vpop.f32.mrf.mxu0
  %v152 = vadd.f32 0.0, %v151
  %153 = vdwg.mxu0
  %v154 = vld [vmem:[%s4] sm:$0xff]
  %v155 = vld [vmem:[%s4 + $0x8] sm:$0xff]
  %v156 = vld [vmem:[%s4 + $0x10] sm:$0xff]
  %v157 = vld [vmem:[%s4 + $0x18] sm:$0xff]
  %v158 = vld [vmem:[%s5] sm:$0xff]
  %v159 = vld [vmem:[%s5 + $0x8] sm:$0xff]
  %v160 = vld [vmem:[%s5 + $0x10] sm:$0xff]
  %v161 = vld [vmem:[%s5 + $0x18] sm:$0xff]
  %v162 = vld [vmem:[%s6] sm:$0x1]
  %v163 = vld [vmem:[%s1] sm:$0xff]
  %v164 = vld [vmem:[%s2] sm:$0xff]
  %vm165 = vcmask 261120
  %v167 = vsel %vm165, %v163, 0
  %169 = vmatpush.msra.mxu0 0.0
  %170 = vmatpush.msra.mxu0 0.0
  %171 = vmatpush.msra.mxu0 0.0
  %172 = vmatpush.msra.mxu0 0.0
  %173 = vmatpush.msra.mxu0 0.0
  %174 = vmatpush.msra.mxu0 0.0
  %175 = vmatpush.msra.mxu0 0.0
  %176 = vmatpush.msra.mxu0 0.0
  %177 = vmatpush.msra.mxu0 0.0
  %178 = vmatpush.msra.mxu0 0.0
  %179 = vmatpush.msra.mxu0 0.0
  %180 = vmatpush.msra.mxu0 0.0
  %181 = vmatpush.msra.mxu0 %v157
  %182 = vmatpush.msra.mxu0 %v156
  %183 = vmatpush.msra.mxu0 %v155
  %184 = vmatpush.msra.mxu0 %v154
  %185 = vmatmul.f32.gmra.mxu0 %v167
  %v186 = vpop.f32.mrf.mxu0
  %v187 = vadd.f32 0.0, %v186
  %188 = vdwg.mxu0
  %v189 = vadd.f32 %v131, %v187
  %v190 = vxor.u32 %v189, 2147483648
  %v191 = vmul.f32 %v190, 1.442695
  %v192 = vpow.pop %v191
  %v193 = vadd.f32 %v192, 1.0
  %v194 = vrcp.pop %v193
  %v195 = vmul.f32 %v193, %v194
  %v196 = vsub.f32 1.0, %v195
  %v197 = vmul.f32 %v194, %v196
  %v198 = vadd.f32 %v194, %v197
  %vm199 = vweird.f32 %v193
  %vm200 = vweird.f32 %v194
  %vm201 = vmor %vm199, %vm200
  %v202 = vsel %vm201, %v194, %v198
  %v203 = vand.u32 2147483647, %v193
  %vm204 = vcmp.eq.f32.partialorder %v203, 8.507059e+37
  %v205 = vand.u32 %v193, 2147483648
  %v206 = vor.u32 1.1754944e-38, %v205
  %v207 = vsel %vm204, %v206, %v202
  %v208 = vmul.f32 1.0, %v207
  %v209 = vtanh.pop %v189
  %211 = vrot.lane.b32.xlu0 %v164, 32
  %v212 = vpop.permute.xlu0 %211
  %v214 = vmul.f32 %v208, %v212
  %216 = vrot.lane.b32.xlu0 %v209, 64
  %v217 = vpop.permute.xlu0 %216
  %v219 = vmul.f32 %v208, %v217
  %221 = vrot.lane.b32.xlu0 %v219, 32
  %v222 = vpop.permute.xlu0 %221
  %v224 = vadd.f32 %v214, %v222
  %v225 = vtanh.pop %v224
  %227 = vrot.lane.b32.xlu0 %v225, 64
  %v228 = vpop.permute.xlu0 %227
  %v230 = vmul.f32 %v208, %v228
  %v232 = vperm.slane %v162, 0
  %235 = vrot.lane.b32.xlu0 %v230, 32
  %v236 = vpop.permute.xlu0 %235
  %v237 = vsel %vm165, %v236, 0
  %239 = vmatpush.msra.mxu0 0.0
  %240 = vmatpush.msra.mxu0 0.0
  %241 = vmatpush.msra.mxu0 0.0
  %242 = vmatpush.msra.mxu0 0.0
  %243 = vmatpush.msra.mxu0 0.0
  %244 = vmatpush.msra.mxu0 0.0
  %245 = vmatpush.msra.mxu0 0.0
  %246 = vmatpush.msra.mxu0 0.0
  %247 = vmatpush.msra.mxu0 0.0
  %248 = vmatpush.msra.mxu0 0.0
  %249 = vmatpush.msra.mxu0 0.0
  %250 = vmatpush.msra.mxu0 0.0
  %251 = vmatpush.msra.mxu0 %v161
  %252 = vmatpush.msra.mxu0 %v160
  %253 = vmatpush.msra.mxu0 %v159
  %254 = vmatpush.msra.mxu0 %v158
  %255 = vmatmul.f32.gmra.mxu0 %v237
  %v256 = vpop.f32.mrf.mxu0
  %v257 = vadd.f32 %v232, %v256
  %258 = vdwg.mxu0
  %259 = vst [vmem:[%s7] sm:$0xff] %v257
  %260 = vmatpush.msra.mxu0 0.0
  %261 = vmatpush.msra.mxu0 0.0
  %262 = vmatpush.msra.mxu0 0.0
  %263 = vmatpush.msra.mxu0 0.0
  %264 = vmatpush.msra.mxu0 0.0
  %265 = vmatpush.msra.mxu0 0.0
  %266 = vmatpush.msra.mxu0 0.0
  %267 = vmatpush.msra.mxu0 0.0
  %268 = vmatpush.msra.mxu0 0.0
  %269 = vmatpush.msra.mxu0 0.0
  %270 = vmatpush.msra.mxu0 0.0
  %271 = vmatpush.msra.mxu0 0.0
  %272 = vmatpush.msra.mxu0 %v157
  %273 = vmatpush.msra.mxu0 %v156
  %274 = vmatpush.msra.mxu0 %v155
  %275 = vmatpush.msra.mxu0 %v154
  %276 = vmatmul.f32.gmra.mxu0 %v237
  %v277 = vpop.f32.mrf.mxu0
  %v278 = vadd.f32 0.0, %v277
  %279 = vdwg.mxu0
  %v280 = vadd.f32 %v134, %v278
  %v281 = vxor.u32 %v280, 2147483648
  %v282 = vmul.f32 %v281, 1.442695
  %v283 = vpow.pop %v282
  %v284 = vadd.f32 %v283, 1.0
  %v285 = vrcp.pop %v284
  %v286 = vmul.f32 %v284, %v285
  %v287 = vsub.f32 1.0, %v286
  %v288 = vmul.f32 %v285, %v287
  %v289 = vadd.f32 %v285, %v288
  %vm290 = vweird.f32 %v284
  %vm291 = vweird.f32 %v285
  %vm292 = vmor %vm290, %vm291
  %v293 = vsel %vm292, %v285, %v289
  %v294 = vand.u32 2147483647, %v284
  %vm295 = vcmp.eq.f32.partialorder %v294, 8.507059e+37
  %v296 = vand.u32 %v284, 2147483648
  %v297 = vor.u32 1.1754944e-38, %v296
  %v298 = vsel %vm295, %v297, %v293
  %v299 = vmul.f32 1.0, %v298
  %v300 = vtanh.pop %v280
  %v301 = vmul.f32 %v299, %v224
  %303 = vrot.lane.b32.xlu0 %v300, 64
  %v304 = vpop.permute.xlu0 %303
  %v306 = vmul.f32 %v299, %v304
  %308 = vrot.lane.b32.xlu0 %v306, 32
  %v309 = vpop.permute.xlu0 %308
  %v311 = vadd.f32 %v301, %v309
  %v312 = vtanh.pop %v311
  %314 = vrot.lane.b32.xlu0 %v312, 64
  %v315 = vpop.permute.xlu0 %314
  %v317 = vmul.f32 %v299, %v315
  %319 = vrot.lane.b32.xlu0 %v317, 32
  %v320 = vpop.permute.xlu0 %319
  %v321 = vsel %vm165, %v320, 0
  %323 = vmatpush.msra.mxu0 0.0
  %324 = vmatpush.msra.mxu0 0.0
  %325 = vmatpush.msra.mxu0 0.0
  %326 = vmatpush.msra.mxu0 0.0
  %327 = vmatpush.msra.mxu0 0.0
  %328 = vmatpush.msra.mxu0 0.0
  %329 = vmatpush.msra.mxu0 0.0
  %330 = vmatpush.msra.mxu0 0.0
  %331 = vmatpush.msra.mxu0 0.0
  %332 = vmatpush.msra.mxu0 0.0
  %333 = vmatpush.msra.mxu0 0.0
  %334 = vmatpush.msra.mxu0 0.0
  %335 = vmatpush.msra.mxu0 %v161
  %336 = vmatpush.msra.mxu0 %v160
  %337 = vmatpush.msra.mxu0 %v159
  %338 = vmatpush.msra.mxu0 %v158
  %339 = vmatmul.f32.gmra.mxu0 %v321
  %v340 = vpop.f32.mrf.mxu0
  %v341 = vadd.f32 %v232, %v340
  %342 = vdwg.mxu0
  %343 = vst [vmem:[%s7 + $0x8] sm:$0xff] %v341
  %344 = vmatpush.msra.mxu0 0.0
  %345 = vmatpush.msra.mxu0 0.0
  %346 = vmatpush.msra.mxu0 0.0
  %347 = vmatpush.msra.mxu0 0.0
  %348 = vmatpush.msra.mxu0 0.0
  %349 = vmatpush.msra.mxu0 0.0
  %350 = vmatpush.msra.mxu0 0.0
  %351 = vmatpush.msra.mxu0 0.0
  %352 = vmatpush.msra.mxu0 0.0
  %353 = vmatpush.msra.mxu0 0.0
  %354 = vmatpush.msra.mxu0 0.0
  %355 = vmatpush.msra.mxu0 0.0
  %356 = vmatpush.msra.mxu0 %v157
  %357 = vmatpush.msra.mxu0 %v156
  %358 = vmatpush.msra.mxu0 %v155
  %359 = vmatpush.msra.mxu0 %v154
  %360 = vmatmul.f32.gmra.mxu0 %v321
  %v361 = vpop.f32.mrf.mxu0
  %v362 = vadd.f32 0.0, %v361
  %363 = vdwg.mxu0
  %v364 = vadd.f32 %v137, %v362
  %v365 = vxor.u32 %v364, 2147483648
  %v366 = vmul.f32 %v365, 1.442695
  %v367 = vpow.pop %v366
  %v368 = vadd.f32 %v367, 1.0
  %v369 = vrcp.pop %v368
  %v370 = vmul.f32 %v368, %v369
  %v371 = vsub.f32 1.0, %v370
  %v372 = vmul.f32 %v369, %v371
  %v373 = vadd.f32 %v369, %v372
  %vm374 = vweird.f32 %v368
  %vm375 = vweird.f32 %v369
  %vm376 = vmor %vm374, %vm375
  %v377 = vsel %vm376, %v369, %v373
  %v378 = vand.u32 2147483647, %v368
  %vm379 = vcmp.eq.f32.partialorder %v378, 8.507059e+37
  %v380 = vand.u32 %v368, 2147483648
  %v381 = vor.u32 1.1754944e-38, %v380
  %v382 = vsel %vm379, %v381, %v377
  %v383 = vmul.f32 1.0, %v382
  %v384 = vtanh.pop %v364
  %v385 = vmul.f32 %v383, %v311
  %387 = vrot.lane.b32.xlu0 %v384, 64
  %v388 = vpop.permute.xlu0 %387
  %v390 = vmul.f32 %v383, %v388
  %392 = vrot.lane.b32.xlu0 %v390, 32
  %v393 = vpop.permute.xlu0 %392
  %v395 = vadd.f32 %v385, %v393
  %v396 = vtanh.pop %v395
  %398 = vrot.lane.b32.xlu0 %v396, 64
  %v399 = vpop.permute.xlu0 %398
  %v401 = vmul.f32 %v383, %v399
  %403 = vrot.lane.b32.xlu0 %v401, 32
  %v404 = vpop.permute.xlu0 %403
  %v405 = vsel %vm165, %v404, 0
  %407 = vmatpush.msra.mxu0 0.0
  %408 = vmatpush.msra.mxu0 0.0
  %409 = vmatpush.msra.mxu0 0.0
  %410 = vmatpush.msra.mxu0 0.0
  %411 = vmatpush.msra.mxu0 0.0
  %412 = vmatpush.msra.mxu0 0.0
  %413 = vmatpush.msra.mxu0 0.0
  %414 = vmatpush.msra.mxu0 0.0
  %415 = vmatpush.msra.mxu0 0.0
  %416 = vmatpush.msra.mxu0 0.0
  %417 = vmatpush.msra.mxu0 0.0
  %418 = vmatpush.msra.mxu0 0.0
  %419 = vmatpush.msra.mxu0 %v161
  %420 = vmatpush.msra.mxu0 %v160
  %421 = vmatpush.msra.mxu0 %v159
  %422 = vmatpush.msra.mxu0 %v158
  %423 = vmatmul.f32.gmra.mxu0 %v405
  %v424 = vpop.f32.mrf.mxu0
  %v425 = vadd.f32 %v232, %v424
  %426 = vdwg.mxu0
  %427 = vst [vmem:[%s7 + $0x10] sm:$0xff] %v425
  %428 = vmatpush.msra.mxu0 0.0
  %429 = vmatpush.msra.mxu0 0.0
  %430 = vmatpush.msra.mxu0 0.0
  %431 = vmatpush.msra.mxu0 0.0
  %432 = vmatpush.msra.mxu0 0.0
  %433 = vmatpush.msra.mxu0 0.0
  %434 = vmatpush.msra.mxu0 0.0
  %435 = vmatpush.msra.mxu0 0.0
  %436 = vmatpush.msra.mxu0 0.0
  %437 = vmatpush.msra.mxu0 0.0
  %438 = vmatpush.msra.mxu0 0.0
  %439 = vmatpush.msra.mxu0 0.0
  %440 = vmatpush.msra.mxu0 %v157
  %441 = vmatpush.msra.mxu0 %v156
  %442 = vmatpush.msra.mxu0 %v155
  %443 = vmatpush.msra.mxu0 %v154
  %444 = vmatmul.f32.gmra.mxu0 %v405
  %v445 = vpop.f32.mrf.mxu0
  %v446 = vadd.f32 0.0, %v445
  %447 = vdwg.mxu0
  %v448 = vadd.f32 %v140, %v446
  %v449 = vxor.u32 %v448, 2147483648
  %v450 = vmul.f32 %v449, 1.442695
  %v451 = vpow.pop %v450
  %v452 = vadd.f32 %v451, 1.0
  %v453 = vrcp.pop %v452
  %v454 = vmul.f32 %v452, %v453
  %v455 = vsub.f32 1.0, %v454
  %v456 = vmul.f32 %v453, %v455
  %v457 = vadd.f32 %v453, %v456
  %vm458 = vweird.f32 %v452
  %vm459 = vweird.f32 %v453
  %vm460 = vmor %vm458, %vm459
  %v461 = vsel %vm460, %v453, %v457
  %v462 = vand.u32 2147483647, %v452
  %vm463 = vcmp.eq.f32.partialorder %v462, 8.507059e+37
  %v464 = vand.u32 %v452, 2147483648
  %v465 = vor.u32 1.1754944e-38, %v464
  %v466 = vsel %vm463, %v465, %v461
  %v467 = vmul.f32 1.0, %v466
  %v468 = vtanh.pop %v448
  %v469 = vmul.f32 %v467, %v395
  %471 = vrot.lane.b32.xlu0 %v468, 64
  %v472 = vpop.permute.xlu0 %471
  %v474 = vmul.f32 %v467, %v472
  %476 = vrot.lane.b32.xlu0 %v474, 32
  %v477 = vpop.permute.xlu0 %476
  %v479 = vadd.f32 %v469, %v477
  %v480 = vtanh.pop %v479
  %482 = vrot.lane.b32.xlu0 %v480, 64
  %v483 = vpop.permute.xlu0 %482
  %v485 = vmul.f32 %v467, %v483
  %487 = vrot.lane.b32.xlu0 %v485, 32
  %v488 = vpop.permute.xlu0 %487
  %v489 = vsel %vm165, %v488, 0
  %491 = vmatpush.msra.mxu0 0.0
  %492 = vmatpush.msra.mxu0 0.0
  %493 = vmatpush.msra.mxu0 0.0
  %494 = vmatpush.msra.mxu0 0.0
  %495 = vmatpush.msra.mxu0 0.0
  %496 = vmatpush.msra.mxu0 0.0
  %497 = vmatpush.msra.mxu0 0.0
  %498 = vmatpush.msra.mxu0 0.0
  %499 = vmatpush.msra.mxu0 0.0
  %500 = vmatpush.msra.mxu0 0.0
  %501 = vmatpush.msra.mxu0 0.0
  %502 = vmatpush.msra.mxu0 0.0
  %503 = vmatpush.msra.mxu0 %v161
  %504 = vmatpush.msra.mxu0 %v160
  %505 = vmatpush.msra.mxu0 %v159
  %506 = vmatpush.msra.mxu0 %v158
  %507 = vmatmul.f32.gmra.mxu0 %v489
  %v508 = vpop.f32.mrf.mxu0
  %v509 = vadd.f32 %v232, %v508
  %510 = vdwg.mxu0
  %511 = vst [vmem:[%s7 + $0x18] sm:$0xff] %v509
  %512 = vmatpush.msra.mxu0 0.0
  %513 = vmatpush.msra.mxu0 0.0
  %514 = vmatpush.msra.mxu0 0.0
  %515 = vmatpush.msra.mxu0 0.0
  %516 = vmatpush.msra.mxu0 0.0
  %517 = vmatpush.msra.mxu0 0.0
  %518 = vmatpush.msra.mxu0 0.0
  %519 = vmatpush.msra.mxu0 0.0
  %520 = vmatpush.msra.mxu0 0.0
  %521 = vmatpush.msra.mxu0 0.0
  %522 = vmatpush.msra.mxu0 0.0
  %523 = vmatpush.msra.mxu0 0.0
  %524 = vmatpush.msra.mxu0 %v157
  %525 = vmatpush.msra.mxu0 %v156
  %526 = vmatpush.msra.mxu0 %v155
  %527 = vmatpush.msra.mxu0 %v154
  %528 = vmatmul.f32.gmra.mxu0 %v489
  %v529 = vpop.f32.mrf.mxu0
  %v530 = vadd.f32 0.0, %v529
  %531 = vdwg.mxu0
  %v532 = vadd.f32 %v143, %v530
  %v533 = vxor.u32 %v532, 2147483648
  %v534 = vmul.f32 %v533, 1.442695
  %v535 = vpow.pop %v534
  %v536 = vadd.f32 %v535, 1.0
  %v537 = vrcp.pop %v536
  %v538 = vmul.f32 %v536, %v537
  %v539 = vsub.f32 1.0, %v538
  %v540 = vmul.f32 %v537, %v539
  %v541 = vadd.f32 %v537, %v540
  %vm542 = vweird.f32 %v536
  %vm543 = vweird.f32 %v537
  %vm544 = vmor %vm542, %vm543
  %v545 = vsel %vm544, %v537, %v541
  %v546 = vand.u32 2147483647, %v536
  %vm547 = vcmp.eq.f32.partialorder %v546, 8.507059e+37
  %v548 = vand.u32 %v536, 2147483648
  %v549 = vor.u32 1.1754944e-38, %v548
  %v550 = vsel %vm547, %v549, %v545
  %v551 = vmul.f32 1.0, %v550
  %v552 = vtanh.pop %v532
  %v553 = vmul.f32 %v551, %v479
  %555 = vrot.lane.b32.xlu0 %v552, 64
  %v556 = vpop.permute.xlu0 %555
  %v558 = vmul.f32 %v551, %v556
  %560 = vrot.lane.b32.xlu0 %v558, 32
  %v561 = vpop.permute.xlu0 %560
  %v563 = vadd.f32 %v553, %v561
  %v564 = vtanh.pop %v563
  %566 = vrot.lane.b32.xlu0 %v564, 64
  %v567 = vpop.permute.xlu0 %566
  %v569 = vmul.f32 %v551, %v567
  %571 = vrot.lane.b32.xlu0 %v569, 32
  %v572 = vpop.permute.xlu0 %571
  %v573 = vsel %vm165, %v572, 0
  %575 = vmatpush.msra.mxu0 0.0
  %576 = vmatpush.msra.mxu0 0.0
  %577 = vmatpush.msra.mxu0 0.0
  %578 = vmatpush.msra.mxu0 0.0
  %579 = vmatpush.msra.mxu0 0.0
  %580 = vmatpush.msra.mxu0 0.0
  %581 = vmatpush.msra.mxu0 0.0
  %582 = vmatpush.msra.mxu0 0.0
  %583 = vmatpush.msra.mxu0 0.0
  %584 = vmatpush.msra.mxu0 0.0
  %585 = vmatpush.msra.mxu0 0.0
  %586 = vmatpush.msra.mxu0 0.0
  %587 = vmatpush.msra.mxu0 %v161
  %588 = vmatpush.msra.mxu0 %v160
  %589 = vmatpush.msra.mxu0 %v159
  %590 = vmatpush.msra.mxu0 %v158
  %591 = vmatmul.f32.gmra.mxu0 %v573
  %v592 = vpop.f32.mrf.mxu0
  %v593 = vadd.f32 %v232, %v592
  %594 = vdwg.mxu0
  %595 = vst [vmem:[%s7 + $0x20] sm:$0xff] %v593
  %596 = vmatpush.msra.mxu0 0.0
  %597 = vmatpush.msra.mxu0 0.0
  %598 = vmatpush.msra.mxu0 0.0
  %599 = vmatpush.msra.mxu0 0.0
  %600 = vmatpush.msra.mxu0 0.0
  %601 = vmatpush.msra.mxu0 0.0
  %602 = vmatpush.msra.mxu0 0.0
  %603 = vmatpush.msra.mxu0 0.0
  %604 = vmatpush.msra.mxu0 0.0
  %605 = vmatpush.msra.mxu0 0.0
  %606 = vmatpush.msra.mxu0 0.0
  %607 = vmatpush.msra.mxu0 0.0
  %608 = vmatpush.msra.mxu0 %v157
  %609 = vmatpush.msra.mxu0 %v156
  %610 = vmatpush.msra.mxu0 %v155
  %611 = vmatpush.msra.mxu0 %v154
  %612 = vmatmul.f32.gmra.mxu0 %v573
  %v613 = vpop.f32.mrf.mxu0
  %v614 = vadd.f32 0.0, %v613
  %615 = vdwg.mxu0
  %v616 = vadd.f32 %v146, %v614
  %v617 = vxor.u32 %v616, 2147483648
  %v618 = vmul.f32 %v617, 1.442695
  %v619 = vpow.pop %v618
  %v620 = vadd.f32 %v619, 1.0
  %v621 = vrcp.pop %v620
  %v622 = vmul.f32 %v620, %v621
  %v623 = vsub.f32 1.0, %v622
  %v624 = vmul.f32 %v621, %v623
  %v625 = vadd.f32 %v621, %v624
  %vm626 = vweird.f32 %v620
  %vm627 = vweird.f32 %v621
  %vm628 = vmor %vm626, %vm627
  %v629 = vsel %vm628, %v621, %v625
  %v630 = vand.u32 2147483647, %v620
  %vm631 = vcmp.eq.f32.partialorder %v630, 8.507059e+37
  %v632 = vand.u32 %v620, 2147483648
  %v633 = vor.u32 1.1754944e-38, %v632
  %v634 = vsel %vm631, %v633, %v629
  %v635 = vmul.f32 1.0, %v634
  %v636 = vtanh.pop %v616
  %v637 = vmul.f32 %v635, %v563
  %639 = vrot.lane.b32.xlu0 %v636, 64
  %v640 = vpop.permute.xlu0 %639
  %v642 = vmul.f32 %v635, %v640
  %644 = vrot.lane.b32.xlu0 %v642, 32
  %v645 = vpop.permute.xlu0 %644
  %v647 = vadd.f32 %v637, %v645
  %v648 = vtanh.pop %v647
  %650 = vrot.lane.b32.xlu0 %v648, 64
  %v651 = vpop.permute.xlu0 %650
  %v653 = vmul.f32 %v635, %v651
  %655 = vrot.lane.b32.xlu0 %v653, 32
  %v656 = vpop.permute.xlu0 %655
  %v657 = vsel %vm165, %v656, 0
  %659 = vmatpush.msra.mxu0 0.0
  %660 = vmatpush.msra.mxu0 0.0
  %661 = vmatpush.msra.mxu0 0.0
  %662 = vmatpush.msra.mxu0 0.0
  %663 = vmatpush.msra.mxu0 0.0
  %664 = vmatpush.msra.mxu0 0.0
  %665 = vmatpush.msra.mxu0 0.0
  %666 = vmatpush.msra.mxu0 0.0
  %667 = vmatpush.msra.mxu0 0.0
  %668 = vmatpush.msra.mxu0 0.0
  %669 = vmatpush.msra.mxu0 0.0
  %670 = vmatpush.msra.mxu0 0.0
  %671 = vmatpush.msra.mxu0 %v161
  %672 = vmatpush.msra.mxu0 %v160
  %673 = vmatpush.msra.mxu0 %v159
  %674 = vmatpush.msra.mxu0 %v158
  %675 = vmatmul.f32.gmra.mxu0 %v657
  %v676 = vpop.f32.mrf.mxu0
  %v677 = vadd.f32 %v232, %v676
  %678 = vdwg.mxu0
  %679 = vst [vmem:[%s7 + $0x28] sm:$0xff] %v677
  %680 = vmatpush.msra.mxu0 0.0
  %681 = vmatpush.msra.mxu0 0.0
  %682 = vmatpush.msra.mxu0 0.0
  %683 = vmatpush.msra.mxu0 0.0
  %684 = vmatpush.msra.mxu0 0.0
  %685 = vmatpush.msra.mxu0 0.0
  %686 = vmatpush.msra.mxu0 0.0
  %687 = vmatpush.msra.mxu0 0.0
  %688 = vmatpush.msra.mxu0 0.0
  %689 = vmatpush.msra.mxu0 0.0
  %690 = vmatpush.msra.mxu0 0.0
  %691 = vmatpush.msra.mxu0 0.0
  %692 = vmatpush.msra.mxu0 %v157
  %693 = vmatpush.msra.mxu0 %v156
  %694 = vmatpush.msra.mxu0 %v155
  %695 = vmatpush.msra.mxu0 %v154
  %696 = vmatmul.f32.gmra.mxu0 %v657
  %v697 = vpop.f32.mrf.mxu0
  %v698 = vadd.f32 0.0, %v697
  %699 = vdwg.mxu0
  %v700 = vadd.f32 %v149, %v698
  %v701 = vxor.u32 %v700, 2147483648
  %v702 = vmul.f32 %v701, 1.442695
  %v703 = vpow.pop %v702
  %v704 = vadd.f32 %v703, 1.0
  %v705 = vrcp.pop %v704
  %v706 = vmul.f32 %v704, %v705
  %v707 = vsub.f32 1.0, %v706
  %v708 = vmul.f32 %v705, %v707
  %v709 = vadd.f32 %v705, %v708
  %vm710 = vweird.f32 %v704
  %vm711 = vweird.f32 %v705
  %vm712 = vmor %vm710, %vm711
  %v713 = vsel %vm712, %v705, %v709
  %v714 = vand.u32 2147483647, %v704
  %vm715 = vcmp.eq.f32.partialorder %v714, 8.507059e+37
  %v716 = vand.u32 %v704, 2147483648
  %v717 = vor.u32 1.1754944e-38, %v716
  %v718 = vsel %vm715, %v717, %v713
  %v719 = vmul.f32 1.0, %v718
  %v720 = vtanh.pop %v700
  %v721 = vmul.f32 %v719, %v647
  %723 = vrot.lane.b32.xlu0 %v720, 64
  %v724 = vpop.permute.xlu0 %723
  %v726 = vmul.f32 %v719, %v724
  %728 = vrot.lane.b32.xlu0 %v726, 32
  %v729 = vpop.permute.xlu0 %728
  %v731 = vadd.f32 %v721, %v729
  %v732 = vtanh.pop %v731
  %734 = vrot.lane.b32.xlu0 %v732, 64
  %v735 = vpop.permute.xlu0 %734
  %v737 = vmul.f32 %v719, %v735
  %739 = vrot.lane.b32.xlu0 %v737, 32
  %v740 = vpop.permute.xlu0 %739
  %v741 = vsel %vm165, %v740, 0
  %743 = vmatpush.msra.mxu0 0.0
  %744 = vmatpush.msra.mxu0 0.0
  %745 = vmatpush.msra.mxu0 0.0
  %746 = vmatpush.msra.mxu0 0.0
  %747 = vmatpush.msra.mxu0 0.0
  %748 = vmatpush.msra.mxu0 0.0
  %749 = vmatpush.msra.mxu0 0.0
  %750 = vmatpush.msra.mxu0 0.0
  %751 = vmatpush.msra.mxu0 0.0
  %752 = vmatpush.msra.mxu0 0.0
  %753 = vmatpush.msra.mxu0 0.0
  %754 = vmatpush.msra.mxu0 0.0
  %755 = vmatpush.msra.mxu0 %v161
  %756 = vmatpush.msra.mxu0 %v160
  %757 = vmatpush.msra.mxu0 %v159
  %758 = vmatpush.msra.mxu0 %v158
  %759 = vmatmul.f32.gmra.mxu0 %v741
  %v760 = vpop.f32.mrf.mxu0
  %v761 = vadd.f32 %v232, %v760
  %762 = vdwg.mxu0
  %763 = vst [vmem:[%s7 + $0x30] sm:$0xff] %v761
  %764 = vmatpush.msra.mxu0 0.0
  %765 = vmatpush.msra.mxu0 0.0
  %766 = vmatpush.msra.mxu0 0.0
  %767 = vmatpush.msra.mxu0 0.0
  %768 = vmatpush.msra.mxu0 0.0
  %769 = vmatpush.msra.mxu0 0.0
  %770 = vmatpush.msra.mxu0 0.0
  %771 = vmatpush.msra.mxu0 0.0
  %772 = vmatpush.msra.mxu0 0.0
  %773 = vmatpush.msra.mxu0 0.0
  %774 = vmatpush.msra.mxu0 0.0
  %775 = vmatpush.msra.mxu0 0.0
  %776 = vmatpush.msra.mxu0 %v157
  %777 = vmatpush.msra.mxu0 %v156
  %778 = vmatpush.msra.mxu0 %v155
  %779 = vmatpush.msra.mxu0 %v154
  %780 = vmatmul.f32.gmra.mxu0 %v741
  %v781 = vpop.f32.mrf.mxu0
  %v782 = vadd.f32 0.0, %v781
  %783 = vdwg.mxu0
  %v784 = vadd.f32 %v152, %v782
  %v785 = vxor.u32 %v784, 2147483648
  %v786 = vmul.f32 %v785, 1.442695
  %v787 = vpow.pop %v786
  %v788 = vadd.f32 %v787, 1.0
  %v789 = vrcp.pop %v788
  %v790 = vmul.f32 %v788, %v789
  %v791 = vsub.f32 1.0, %v790
  %v792 = vmul.f32 %v789, %v791
  %v793 = vadd.f32 %v789, %v792
  %vm794 = vweird.f32 %v788
  %vm795 = vweird.f32 %v789
  %vm796 = vmor %vm794, %vm795
  %v797 = vsel %vm796, %v789, %v793
  %v798 = vand.u32 2147483647, %v788
  %vm799 = vcmp.eq.f32.partialorder %v798, 8.507059e+37
  %v800 = vand.u32 %v788, 2147483648
  %v801 = vor.u32 1.1754944e-38, %v800
  %v802 = vsel %vm799, %v801, %v797
  %v803 = vmul.f32 1.0, %v802
  %v804 = vtanh.pop %v784
  %v805 = vmul.f32 %v803, %v731
  %807 = vrot.lane.b32.xlu0 %v804, 64
  %v808 = vpop.permute.xlu0 %807
  %v810 = vmul.f32 %v803, %v808
  %812 = vrot.lane.b32.xlu0 %v810, 32
  %v813 = vpop.permute.xlu0 %812
  %v815 = vadd.f32 %v805, %v813
  %v816 = vtanh.pop %v815
  %818 = vrot.lane.b32.xlu0 %v816, 64
  %v819 = vpop.permute.xlu0 %818
  %v821 = vmul.f32 %v803, %v819
  %823 = vrot.lane.b32.xlu0 %v821, 32
  %v824 = vpop.permute.xlu0 %823
  %v825 = vsel %vm165, %v824, 0
  %827 = vmatpush.msra.mxu0 0.0
  %828 = vmatpush.msra.mxu0 0.0
  %829 = vmatpush.msra.mxu0 0.0
  %830 = vmatpush.msra.mxu0 0.0
  %831 = vmatpush.msra.mxu0 0.0
  %832 = vmatpush.msra.mxu0 0.0
  %833 = vmatpush.msra.mxu0 0.0
  %834 = vmatpush.msra.mxu0 0.0
  %835 = vmatpush.msra.mxu0 0.0
  %836 = vmatpush.msra.mxu0 0.0
  %837 = vmatpush.msra.mxu0 0.0
  %838 = vmatpush.msra.mxu0 0.0
  %839 = vmatpush.msra.mxu0 %v161
  %840 = vmatpush.msra.mxu0 %v160
  %841 = vmatpush.msra.mxu0 %v159
  %842 = vmatpush.msra.mxu0 %v158
  %843 = vmatmul.f32.gmra.mxu0 %v825
  %v844 = vpop.f32.mrf.mxu0
  %v845 = vadd.f32 %v232, %v844
  %846 = vdwg.mxu0
  %847 = vst [vmem:[%s7 + $0x38] sm:$0xff] %v845
  %849 = vst.msk [vmem:[%s8] sm:$0xff] %vm165, %v824
  %851 = vrot.lane.b32.xlu0 %v815, 96
  %v852 = vpop.permute.xlu0 %851
  %854 = vst.msk [vmem:[%s9] sm:$0xff] %vm165, %v852
  // Predicated region
  $region30: #{decoder_lstm_forward.1} parent=0 // pred_check
    _
  $region31: #{decoder_lstm_forward.1} parent=0 // pred_check_branch
    %856 = sbr.rel (0) target = $region33
  $region32: #{decoder_lstm_forward.1} parent=0 // pred_region
    _
  $region33: #{decoder_lstm_forward.1} parent=0 // pred_fallthru
    _
  // Predicated region
  $region34: #{decoder_lstm_forward.1} parent=0 // pred_check
    _
  $region35: #{decoder_lstm_forward.1} parent=0 // pred_check_branch
    %858 = sbr.rel (0) target = $region37
  $region36: #{decoder_lstm_forward.1} parent=0 // pred_region
    _
  $region37: #{decoder_lstm_forward.1} parent=0 // pred_fallthru
    _
  // Predicated region
  $region38: #{decoder_lstm_forward.1} parent=0 // pred_check
    _
  $region39: #{decoder_lstm_forward.1} parent=0 // pred_check_branch
    %860 = sbr.rel (0) target = $region41
  $region40: #{decoder_lstm_forward.1} parent=0 // pred_region
    _
  $region41: #{decoder_lstm_forward.1} parent=0 // pred_fallthru
    _
  // Predicated region
  $region42: #{decoder_lstm_forward.1} parent=0 // pred_check
    _
  $region43: #{decoder_lstm_forward.1} parent=0 // pred_check_branch
    %862 = sbr.rel (0) target = $region45
  $region44: #{decoder_lstm_forward.1} parent=0 // pred_region
    _
  $region45: #{decoder_lstm_forward.1} parent=0 // pred_fallthru
    _
  // Predicated region
  $region46: #{decoder_lstm_forward.1} parent=0 // pred_check
    _
  $region47: #{decoder_lstm_forward.1} parent=0 // pred_check_branch
    %864 = sbr.rel (0) target = $region49
  $region48: #{decoder_lstm_forward.1} parent=0 // pred_region
    _
  $region49: #{decoder_lstm_forward.1} parent=0 // pred_fallthru
    _
  // Predicated region
  $region50: #{decoder_lstm_forward.1} parent=0 // pred_check
    _
  $region51: #{decoder_lstm_forward.1} parent=0 // pred_check_branch
    %866 = sbr.rel (0) target = $region53
  $region52: #{decoder_lstm_forward.1} parent=0 // pred_region
    _
  $region53: #{decoder_lstm_forward.1} parent=0 // pred_fallthru
    _

</llo_original>
